<compile_context>
chip_gen: v5e
topology: v5e:2x2
jax: 0.10.0
libtpu: 0.0.40
codegen_flags: <defaults>
</compile_context>

<pallas_src>
import functools

import jax
import jax.numpy as jnp
from jax.experimental import pallas as pl
from jax.experimental.pallas import tpu as pltpu


def _round_up(x, m):
    return ((x + m - 1) // m) * m


def _center_loss_kernel(feat_ref, lab_ref, cen_hbm, loss_ref, newcen_ref,
                        cen_vmem, sums_ref, cnt_ref, sq_ref, cen_sem,
                        *, alpha, batch, mxu_dtype):
    i = pl.program_id(0)
    c, dp = sums_ref.shape          # num classes, padded feat dim
    tb = feat_ref.shape[0]          # batch tile

    @pl.when(i == 0)
    def _init():
        # Centers are only consumed at finalize: keep them out of the pipelined
        # window and overlap their single DMA with the whole batch reduction.
        pltpu.make_async_copy(cen_hbm, cen_vmem, cen_sem).start()
        sums_ref[...] = jnp.zeros_like(sums_ref)
        cnt_ref[...] = jnp.zeros_like(cnt_ref)
        sq_ref[...] = jnp.zeros_like(sq_ref)

    feats = feat_ref[...]                                      # [TB, Dp] bf16|f32
    feats_f32 = feats.astype(jnp.float32)
    labels_row = lab_ref[...]                                  # [1, TB] int32

    # Transposed onehot [C, TB]: sublane-replicated compare of the lane-major
    # label row against a class iota. Padded rows carry label == C -> all-false.
    cls_iota = jax.lax.broadcasted_iota(jnp.int32, (c, tb), 0)
    onehot_t = (labels_row == cls_iota).astype(jnp.float32)    # [C, TB]

    # MXU: per-class feature sums, canonical [C,TB] x [TB,Dp] contraction.
    prec = (jax.lax.Precision.HIGHEST if mxu_dtype == jnp.float32
            else jax.lax.Precision.DEFAULT)
    sums_ref[...] += jax.lax.dot_general(
        onehot_t.astype(mxu_dtype), feats.astype(mxu_dtype),
        dimension_numbers=(((1,), (0,)), ((), ())),
        precision=prec,
        preferred_element_type=jnp.float32)                    # [C, Dp]

    # Counts fall out in column layout for free.
    cnt_ref[...] += jnp.sum(onehot_t, axis=1, keepdims=True)   # [C, 1]

    # Per-lane partial of sum||f||^2; cross-lane reduce deferred to finalize.
    sq_ref[...] += jnp.sum(feats_f32 * feats_f32, axis=0, keepdims=True)  # [1, Dp]

    @pl.when(i == pl.num_programs(0) - 1)
    def _finalize():
        pltpu.make_async_copy(cen_hbm, cen_vmem, cen_sem).wait()
        cen = cen_vmem[...]                                    # [C, Dp] f32
        sums = sums_ref[...]                                   # [C, Dp]
        counts = cnt_ref[...]                                  # [C, 1]

        # loss = 0.5/B * (sum||f||^2 - 2<sums, cen> + sum_c counts_c*||cen_c||^2)
        sq11 = jnp.sum(sq_ref[...], keepdims=True)             # [1, 1]
        cross = jnp.sum(sums * cen)
        cen_sq = jnp.sum(cen * cen, axis=1, keepdims=True)     # [C, 1]
        wcen = jnp.sum(counts * cen_sq)
        loss_ref[...] = (0.5 / batch) * (sq11 - 2.0 * cross + wcen)
        # TODO(synk): near-zero loss cancels two large terms here; add a direct
        # (f - centers[label])^2 path if exact tiny-loss values matter.

        # EMA update for classes present in the batch; others unchanged.
        means = sums / jnp.maximum(counts, 1.0)
        updated = (1.0 - alpha) * cen + alpha * means
        newcen_ref[...] = jnp.where(counts > 0.0, updated, cen).astype(
            newcen_ref.dtype)


def _vmem_plan():
    """Generation-aware (limit, tile-planning budget) in bytes."""
    try:
        cap = int(pltpu.get_tpu_info().vmem_capacity_bytes)
    except Exception:
        cap = 64 * 1024 * 1024                 # conservative (v7x-sized) fallback
    limit = int(min(cap * 3 // 4, 100 * 1024 * 1024))   # v5e/v6e ~96MiB, v7x ~48MiB
    budget = int(limit * 7 // 10)                        # headroom for compiler scratch
    return limit, budget


def _plan_tiles(B, C, Dp, budget, feat_bytes, block_b=None):
    """Pick batch tile TB, tile count and padded batch.

    Single full-batch tile when it fits; otherwise TB is a multiple of 128
    (lane-major label blocks + MXU-friendly K), capped at 2048."""
    B8 = _round_up(max(int(B), 1), 8)
    # Resident: centers landing buf + sums scratch + new_centers out (+1 buffer
    # headroom), counts + sq partial.
    resident = 4 * (4 * C * Dp) + 4 * (C + Dp)
    # Per batch row: 2x-buffered feature stream, 2x-buffered labels, f32 copy +
    # square temporaries, onehot_T / iota / cast temporaries.
    per_row = 2 * feat_bytes * Dp + 2 * 4 + 8 * Dp + 16 * C
    fit = max((budget - resident) // max(per_row, 1), 0)
    cap = min(int(fit), 2048)
    if block_b is not None:
        cap = max(8, min(int(block_b), 2048))
    if cap >= B8:
        return B8, 1, B8                       # single tile, full-dim blocks
    tb = max(128, (cap // 128) * 128)
    n = -(-B8 // tb)
    tb = _round_up(-(-B8 // n), 128)           # rebalance tiles to cut padding
    return tb, n, tb * n


def center_loss(features, labels, centers, alpha=0.5, *, block_b=None,
                mxu_dtype=jnp.bfloat16):
    """features: [B, D] f32, labels: [B] int, centers: [C, D] f32.

    Returns (loss scalar f32, updated centers [C, D] f32)."""
    features = jnp.asarray(features, jnp.float32)
    centers = jnp.asarray(centers, jnp.float32)
    B, D = features.shape
    C, Dc = centers.shape
    assert Dc == D

    vmem_limit, vmem_budget = _vmem_plan()
    Dp = _round_up(D, 128)                     # lane-dense accumulators / stores
    feat_bytes = 2 if mxu_dtype == jnp.bfloat16 else 4
    tb, num_tiles, B_pad = _plan_tiles(B, C, Dp, vmem_budget, feat_bytes, block_b)

    # Pad in the wrapper so the kernel hot loop carries no ragged-row masking:
    # zero feature rows/cols and out-of-range labels (== C) contribute nothing.
    feats_p = jnp.pad(features, ((0, B_pad - B), (0, Dp - D)))
    if mxu_dtype == jnp.bfloat16:
        feats_p = feats_p.astype(jnp.bfloat16)   # halve the HBM feature stream
    labels_row = jnp.pad(labels.astype(jnp.int32).reshape(1, B),
                         ((0, 0), (0, B_pad - B)), constant_values=C)
    centers_p = jnp.pad(centers, ((0, 0), (0, Dp - D)))

    kernel = functools.partial(_center_loss_kernel, alpha=float(alpha),
                               batch=B, mxu_dtype=mxu_dtype)

    # NOTE: no input_output_aliases — the updated centers are returned
    # functionally; callers wanting in-place semantics can donate at jit time.
    loss, new_centers = pl.pallas_call(
        kernel,
        grid=(num_tiles,),
        in_specs=[
            pl.BlockSpec((tb, Dp), lambda i: (i, 0)),    # features (streamed)
            pl.BlockSpec((1, tb), lambda i: (0, i)),     # labels (lane-major row)
            pl.BlockSpec(memory_space=pl.ANY),           # centers (manual DMA)
        ],
        out_specs=(
            pl.BlockSpec((1, 1), lambda i: (0, 0)),      # loss (written once)
            pl.BlockSpec((C, Dp), lambda i: (0, 0)),     # new centers (written once)
        ),
        out_shape=(
            jax.ShapeDtypeStruct((1, 1), jnp.float32),
            jax.ShapeDtypeStruct((C, Dp), jnp.float32),
        ),
        scratch_shapes=[
            pltpu.VMEM((C, Dp), jnp.float32),   # centers landing buffer
            pltpu.VMEM((C, Dp), jnp.float32),   # per-class feature sums
            pltpu.VMEM((C, 1), jnp.float32),    # per-class counts (column)
            pltpu.VMEM((1, Dp), jnp.float32),   # per-lane partial of sum||f||^2
            pltpu.SemaphoreType.DMA(()),        # centers copy completion
        ],
        compiler_params=pltpu.CompilerParams(
            dimension_semantics=("arbitrary",),  # batch axis is a reduction
            vmem_limit_bytes=vmem_limit,
        ),
    )(feats_p, labels_row, centers_p)
    return loss[0, 0], new_centers[:, :D]


def _reference(features, labels, centers, alpha=0.5):
    B = features.shape[0]
    C = centers.shape[0]
    cb = centers[labels]
    loss = 0.5 * jnp.sum((features - cb) ** 2) / B
    sums = jax.ops.segment_sum(features, labels, num_segments=C)
    counts = jax.ops.segment_sum(jnp.ones((B,), jnp.float32), labels,
                                 num_segments=C)
    means = sums / jnp.maximum(counts, 1.0)[:, None]
    upd = (1 - alpha) * centers + alpha * means
    new_centers = jnp.where((counts > 0)[:, None], upd, centers)
    return loss, new_centers


if __name__ == "__main__":
    key = jax.random.PRNGKey(0)
    k_feat, k_cen, k_lab, k_f2, k_l2 = jax.random.split(key, 5)

    num_classes = 4
    feat_dim = 32
    batch = 16
    alpha = 0.5

    centers = jax.random.normal(k_cen, (num_classes, feat_dim), dtype=jnp.float32)
    features = jax.random.normal(k_feat, (batch, feat_dim), dtype=jnp.float32)
    labels = jax.random.randint(k_lab, (batch,), 0, num_classes, dtype=jnp.int32)

    ref_loss, ref_centers = _reference(features, labels, centers, alpha=alpha)

    # 1) Full-precision path (f32 MXU operands, HIGHEST precision), single tile.
    loss, new_centers = center_loss(features, labels, centers, alpha=alpha,
                                    mxu_dtype=jnp.float32)
    loss, new_centers = jax.block_until_ready((loss, new_centers))
    assert jnp.allclose(loss, ref_loss, atol=1e-4, rtol=1e-4), (loss, ref_loss)
    assert jnp.allclose(new_centers, ref_centers, atol=1e-4, rtol=1e-4)

    # 2) Fast path (bf16 feature stream + bf16 MXU, f32 accumulation) -- default.
    loss_bf, cen_bf = center_loss(features, labels, centers, alpha=alpha)
    loss_bf, cen_bf = jax.block_until_ready((loss_bf, cen_bf))
    assert jnp.allclose(loss_bf, ref_loss, atol=5e-2, rtol=5e-2), (loss_bf, ref_loss)
    assert jnp.allclose(cen_bf, ref_centers, atol=5e-2, rtol=5e-2)

    # 3) Ragged batch (B=12 padded to 16 with zero rows / label==num_classes).
    b3 = 12
    ref_loss_r, ref_cen_r = _reference(features[:b3], labels[:b3], centers,
                                       alpha=alpha)
    loss_r, cen_r = center_loss(features[:b3], labels[:b3], centers, alpha=alpha,
                                mxu_dtype=jnp.float32)
    loss_r, cen_r = jax.block_until_ready((loss_r, cen_r))
    assert jnp.allclose(loss_r, ref_loss_r, atol=1e-4, rtol=1e-4)
    assert jnp.allclose(cen_r, ref_cen_r, atol=1e-4, rtol=1e-4)

    # 4) Multi-tile path: B=512 with an explicit 128-row batch tile (4 grid steps,
    #    lane-major label blocks, init/finalize accumulation across the grid).
    b4 = 512
    feats4 = jax.random.normal(k_f2, (b4, feat_dim), dtype=jnp.float32)
    labels4 = jax.random.randint(k_l2, (b4,), 0, num_classes, dtype=jnp.int32)
    ref_loss4, ref_cen4 = _reference(feats4, labels4, centers, alpha=alpha)
    loss4, cen4 = center_loss(feats4, labels4, centers, alpha=alpha,
                              block_b=128, mxu_dtype=jnp.float32)
    loss4, cen4 = jax.block_until_ready((loss4, cen4))
    assert jnp.allclose(loss4, ref_loss4, atol=2e-3, rtol=2e-3), (loss4, ref_loss4)
    assert jnp.allclose(cen4, ref_cen4, atol=2e-3, rtol=2e-3)

    print("KERNEL_OK")
</pallas_src>

<mosaic_0001>
module attributes {stable_mosaic.version = 11 : i64} {
  func.func @_center_loss_kernel(%arg0: i32, %arg1: memref<16x128xf32, #tpu.memory_space<vmem>>, %arg2: memref<1x16xi32, #tpu.memory_space<vmem>>, %arg3: memref<4x128xf32, #tpu.memory_space<any>>, %arg4: memref<1x1xf32, #tpu.memory_space<vmem>>, %arg5: memref<4x128xf32, #tpu.memory_space<vmem>>, %arg6: memref<4x128xf32, #tpu.memory_space<vmem>>, %arg7: memref<4x128xf32, #tpu.memory_space<vmem>>, %arg8: memref<4x1xf32, #tpu.memory_space<vmem>>, %arg9: memref<1x128xf32, #tpu.memory_space<vmem>>, %arg10: memref<!tpu.dma_semaphore, #tpu.memory_space<semaphore_mem>>) attributes {dimension_semantics = [#tpu.dimension_semantics<arbitrary>], iteration_bounds = array<i64: 1>, scalar_prefetch = 0 : i64, scratch_operands = 5 : i64, tpu.core_type = #tpu.core_type<tc>, window_params = [{transform_indices = @transform_0, window_bounds = array<i64: 16, 128>}, {transform_indices = @transform_1, window_bounds = array<i64: 1, 16>}, {}, {pipeline_mode = #tpu.pipeline_mode<synchronous>, transform_indices = @transform_3, window_bounds = array<i64: 1, 1>}, {pipeline_mode = #tpu.pipeline_mode<synchronous>, transform_indices = @transform_4, window_bounds = array<i64: 4, 128>}]} {
    %c0_i32 = arith.constant 0 : i32
    %0 = arith.cmpi eq, %arg0, %c0_i32 : i32
    %1 = arith.extui %0 : i1 to i32
    %c0_i32_0 = arith.constant 0 : i32
    %2 = arith.cmpi ne, %1, %c0_i32_0 : i32
    scf.if %2 {
      tpu.enqueue_dma source(%arg3 : memref<4x128xf32, #tpu.memory_space<any>>) target(%arg6 : memref<4x128xf32, #tpu.memory_space<vmem>>) target_semaphore(%arg10 : memref<!tpu.dma_semaphore, #tpu.memory_space<semaphore_mem>>)
      %cst_20 = arith.constant 0.000000e+00 : f32
      %28 = vector.broadcast %cst_20 : f32 to vector<4x128xf32>
      %c0_21 = arith.constant 0 : index
      %c0_22 = arith.constant 0 : index
      %29 = vector.load %arg7[%c0_21, %c0_22] : memref<4x128xf32, #tpu.memory_space<vmem>>, vector<4x128xf32>
      tpu.vector_store %arg7[%c0_21, %c0_22], %28 {strides = array<i32>} : memref<4x128xf32, #tpu.memory_space<vmem>>, vector<4x128xf32>,
      %cst_23 = arith.constant 0.000000e+00 : f32
      %30 = vector.broadcast %cst_23 : f32 to vector<4x1xf32>
      %c0_24 = arith.constant 0 : index
      %c0_25 = arith.constant 0 : index
      %31 = vector.load %arg8[%c0_24, %c0_25] : memref<4x1xf32, #tpu.memory_space<vmem>>, vector<4x1xf32>
      tpu.vector_store %arg8[%c0_24, %c0_25], %30 {strides = array<i32>} : memref<4x1xf32, #tpu.memory_space<vmem>>, vector<4x1xf32>,
      %cst_26 = arith.constant 0.000000e+00 : f32
      %32 = vector.broadcast %cst_26 : f32 to vector<1x128xf32>
      %c0_27 = arith.constant 0 : index
      %c0_28 = arith.constant 0 : index
      %33 = vector.load %arg9[%c0_27, %c0_28] : memref<1x128xf32, #tpu.memory_space<vmem>>, vector<1x128xf32>
      tpu.vector_store %arg9[%c0_27, %c0_28], %32 {strides = array<i32>} : memref<1x128xf32, #tpu.memory_space<vmem>>, vector<1x128xf32>,
    } else {
    }
    %c0 = arith.constant 0 : index
    %c0_1 = arith.constant 0 : index
    %3 = vector.load %arg1[%c0, %c0_1] : memref<16x128xf32, #tpu.memory_space<vmem>>, vector<16x128xf32>
    %c0_2 = arith.constant 0 : index
    %c0_3 = arith.constant 0 : index
    %4 = vector.load %arg2[%c0_2, %c0_3] : memref<1x16xi32, #tpu.memory_space<vmem>>, vector<1x16xi32>
    %5 = tpu.iota {dimensions = array<i32: 0>} : vector<4x16xi32>
    %6 = vector.broadcast %4 : vector<1x16xi32> to vector<4x16xi32>
    %7 = arith.cmpi eq, %6, %5 : vector<4x16xi32>
    %8 = arith.extui %7 : vector<4x16xi1> to vector<4x16xi32>
    %9 = arith.sitofp %8 : vector<4x16xi32> to vector<4x16xf32>
    %c0_4 = arith.constant 0 : index
    %c0_5 = arith.constant 0 : index
    %10 = vector.load %arg7[%c0_4, %c0_5] : memref<4x128xf32, #tpu.memory_space<vmem>>, vector<4x128xf32>
    %cst = arith.constant dense<0.000000e+00> : vector<4x128xf32>
    %11 = tpu.matmul %9, %3, %cst {dimension_numbers = #tpu.dot_dimension_numbers<[1], [0], [0], [1], [0, 0, 1, 1], [], []>, precision = #tpu.contract_precision<fp32>} : vector<4x16xf32>, vector<16x128xf32>, vector<4x128xf32> -> vector<4x128xf32>
    %12 = arith.addf %10, %11 : vector<4x128xf32>
    %c0_6 = arith.constant 0 : index
    %c0_7 = arith.constant 0 : index
    %13 = vector.load %arg7[%c0_6, %c0_7] : memref<4x128xf32, #tpu.memory_space<vmem>>, vector<4x128xf32>
    tpu.vector_store %arg7[%c0_6, %c0_7], %12 {strides = array<i32>} : memref<4x128xf32, #tpu.memory_space<vmem>>, vector<4x128xf32>,
    %c0_8 = arith.constant 0 : index
    %c0_9 = arith.constant 0 : index
    %14 = vector.load %arg8[%c0_8, %c0_9] : memref<4x1xf32, #tpu.memory_space<vmem>>, vector<4x1xf32>
    %cst_10 = arith.constant dense<0.000000e+00> : vector<4xf32>
    %15 = vector.multi_reduction <add>, %9, %cst_10 [1] : vector<4x16xf32> to vector<4xf32>
    %16 = vector.shape_cast %15 : vector<4xf32> to vector<4x1xf32>
    %17 = arith.addf %14, %16 : vector<4x1xf32>
    %c0_11 = arith.constant 0 : index
    %c0_12 = arith.constant 0 : index
    %18 = vector.load %arg8[%c0_11, %c0_12] : memref<4x1xf32, #tpu.memory_space<vmem>>, vector<4x1xf32>
    tpu.vector_store %arg8[%c0_11, %c0_12], %17 {strides = array<i32>} : memref<4x1xf32, #tpu.memory_space<vmem>>, vector<4x1xf32>,
    %c0_13 = arith.constant 0 : index
    %c0_14 = arith.constant 0 : index
    %19 = vector.load %arg9[%c0_13, %c0_14] : memref<1x128xf32, #tpu.memory_space<vmem>>, vector<1x128xf32>
    %20 = arith.mulf %3, %3 : vector<16x128xf32>
    %cst_15 = arith.constant dense<0.000000e+00> : vector<128xf32>
    %21 = vector.multi_reduction <add>, %20, %cst_15 [0] : vector<16x128xf32> to vector<128xf32>
    %22 = vector.shape_cast %21 : vector<128xf32> to vector<1x128xf32>
    %23 = arith.addf %19, %22 : vector<1x128xf32>
    %c0_16 = arith.constant 0 : index
    %c0_17 = arith.constant 0 : index
    %24 = vector.load %arg9[%c0_16, %c0_17] : memref<1x128xf32, #tpu.memory_space<vmem>>, vector<1x128xf32>
    tpu.vector_store %arg9[%c0_16, %c0_17], %23 {strides = array<i32>} : memref<1x128xf32, #tpu.memory_space<vmem>>, vector<1x128xf32>,
    %c0_i32_18 = arith.constant 0 : i32
    %25 = arith.cmpi eq, %arg0, %c0_i32_18 : i32
    %26 = arith.extui %25 : i1 to i32
    %c0_i32_19 = arith.constant 0 : i32
    %27 = arith.cmpi ne, %26, %c0_i32_19 : i32
    scf.if %27 {
      tpu.wait_dma2 semaphore(%arg10 : memref<!tpu.dma_semaphore, #tpu.memory_space<semaphore_mem>>) src(%arg3 : memref<4x128xf32, #tpu.memory_space<any>>) dst(%arg6 : memref<4x128xf32, #tpu.memory_space<vmem>>)
      %c0_20 = arith.constant 0 : index
      %c0_21 = arith.constant 0 : index
      %28 = vector.load %arg6[%c0_20, %c0_21] : memref<4x128xf32, #tpu.memory_space<vmem>>, vector<4x128xf32>
      %c0_22 = arith.constant 0 : index
      %c0_23 = arith.constant 0 : index
      %29 = vector.load %arg7[%c0_22, %c0_23] : memref<4x128xf32, #tpu.memory_space<vmem>>, vector<4x128xf32>
      %c0_24 = arith.constant 0 : index
      %c0_25 = arith.constant 0 : index
      %30 = vector.load %arg8[%c0_24, %c0_25] : memref<4x1xf32, #tpu.memory_space<vmem>>, vector<4x1xf32>
      %c0_26 = arith.constant 0 : index
      %c0_27 = arith.constant 0 : index
      %31 = vector.load %arg9[%c0_26, %c0_27] : memref<1x128xf32, #tpu.memory_space<vmem>>, vector<1x128xf32>
      %32 = vector.shape_cast %31 : vector<1x128xf32> to vector<1x1x128xf32>
      %cst_28 = arith.constant dense<0.000000e+00> : vector<1xf32>
      %33 = vector.multi_reduction <add>, %32, %cst_28 [1, 2] : vector<1x1x128xf32> to vector<1xf32>
      %34 = vector.shape_cast %33 : vector<1xf32> to vector<1x1x1xf32>
      %35 = vector.extract %34[0, 0, 0] : f32 from vector<1x1x1xf32>
      %36 = vector.broadcast %35 : f32 to vector<1x1xf32>
      %37 = arith.mulf %29, %28 : vector<4x128xf32>
      %38 = vector.shape_cast %37 : vector<4x128xf32> to vector<1x4x128xf32>
      %cst_29 = arith.constant dense<0.000000e+00> : vector<1xf32>
      %39 = vector.multi_reduction <add>, %38, %cst_29 [1, 2] : vector<1x4x128xf32> to vector<1xf32>
      %40 = vector.shape_cast %39 : vector<1xf32> to vector<1x1x1xf32>
      %41 = vector.extract %40[0, 0, 0] : f32 from vector<1x1x1xf32>
      %42 = arith.mulf %28, %28 : vector<4x128xf32>
      %cst_30 = arith.constant dense<0.000000e+00> : vector<4xf32>
      %43 = vector.multi_reduction <add>, %42, %cst_30 [1] : vector<4x128xf32> to vector<4xf32>
      %44 = vector.shape_cast %43 : vector<4xf32> to vector<4x1xf32>
      %45 = arith.mulf %30, %44 : vector<4x1xf32>
      %46 = vector.shape_cast %45 : vector<4x1xf32> to vector<1x4x1xf32>
      %cst_31 = arith.constant dense<0.000000e+00> : vector<1xf32>
      %47 = vector.multi_reduction <add>, %46, %cst_31 [1, 2] : vector<1x4x1xf32> to vector<1xf32>
      %48 = vector.shape_cast %47 : vector<1xf32> to vector<1x1x1xf32>
      %49 = vector.extract %48[0, 0, 0] : f32 from vector<1x1x1xf32>
      %cst_32 = arith.constant 2.000000e+00 : f32
      %50 = arith.mulf %cst_32, %41 : f32
      %51 = vector.broadcast %50 : f32 to vector<1x1xf32>
      %52 = arith.subf %36, %51 : vector<1x1xf32>
      %53 = vector.broadcast %49 : f32 to vector<1x1xf32>
      %54 = arith.addf %52, %53 : vector<1x1xf32>
      %cst_33 = arith.constant 3.125000e-02 : f32
      %55 = vector.broadcast %cst_33 : f32 to vector<1x1xf32>
      %56 = arith.mulf %55, %54 : vector<1x1xf32>
      %c0_34 = arith.constant 0 : index
      %c0_35 = arith.constant 0 : index
      %57 = vector.load %arg4[%c0_34, %c0_35] : memref<1x1xf32, #tpu.memory_space<vmem>>, vector<1x1xf32>
      tpu.vector_store %arg4[%c0_34, %c0_35], %56 {strides = array<i32>} : memref<1x1xf32, #tpu.memory_space<vmem>>, vector<1x1xf32>,
      %cst_36 = arith.constant 1.000000e+00 : f32
      %58 = vector.broadcast %cst_36 : f32 to vector<4x1xf32>
      %59 = arith.maximumf %30, %58 : vector<4x1xf32>
      %60 = vector.broadcast %59 : vector<4x1xf32> to vector<4x128xf32>
      %61 = arith.divf %29, %60 : vector<4x128xf32>
      %cst_37 = arith.constant 5.000000e-01 : f32
      %62 = vector.broadcast %cst_37 : f32 to vector<4x128xf32>
      %63 = arith.mulf %62, %28 : vector<4x128xf32>
      %cst_38 = arith.constant 5.000000e-01 : f32
      %64 = vector.broadcast %cst_38 : f32 to vector<4x128xf32>
      %65 = arith.mulf %64, %61 : vector<4x128xf32>
      %66 = arith.addf %63, %65 : vector<4x128xf32>
      %cst_39 = arith.constant 0.000000e+00 : f32
      %67 = vector.broadcast %cst_39 : f32 to vector<4x1xf32>
      %68 = arith.cmpf ogt, %30, %67 : vector<4x1xf32>
      %69 = vector.shape_cast %68 : vector<4x1xi1> to vector<4x1xi1>
      %70 = vector.broadcast %69 : vector<4x1xi1> to vector<4x128xi1>
      %71 = arith.select %70, %66, %28 : vector<4x128xi1>, vector<4x128xf32>
      %c0_40 = arith.constant 0 : index
      %c0_41 = arith.constant 0 : index
      %72 = vector.load %arg5[%c0_40, %c0_41] : memref<4x128xf32, #tpu.memory_space<vmem>>, vector<4x128xf32>
      tpu.vector_store %arg5[%c0_40, %c0_41], %71 {strides = array<i32>} : memref<4x128xf32, #tpu.memory_space<vmem>>, vector<4x128xf32>,
    } else {
    }
    return
  }
  func.func @transform_0(%arg0: i32) -> (i32, i32) {
    %c0_i32 = arith.constant 0 : i32
    %c0_i32_0 = arith.constant 0 : i32
    return %arg0, %c0_i32 : i32, i32
  }
  func.func @transform_1(%arg0: i32) -> (i32, i32) {
    %c0_i32 = arith.constant 0 : i32
    %c0_i32_0 = arith.constant 0 : i32
    return %c0_i32, %arg0 : i32, i32
  }
  func.func @transform_3(%arg0: i32) -> (i32, i32) {
    %c0_i32 = arith.constant 0 : i32
    %c0_i32_0 = arith.constant 0 : i32
    %c0_i32_1 = arith.constant 0 : i32
    return %c0_i32, %c0_i32_0 : i32, i32
  }
  func.func @transform_4(%arg0: i32) -> (i32, i32) {
    %c0_i32 = arith.constant 0 : i32
    %c0_i32_0 = arith.constant 0 : i32
    %c0_i32_1 = arith.constant 0 : i32
    return %c0_i32, %c0_i32_0 : i32, i32
  }
}

</mosaic_0001>

<llo_original>
// kernel: tpu_custom_call.1
$region0: #{tpu_custom_call.1}
  #allocation0 [shape = 'u32[]', space=smem, size = 0x4, offset = 0x4, fixed_abs, tag = 'smem constant byte address 0x4 - core index']
  #allocation1 [shape = 'u32[72,128]{1,0:T(1,128)}', space=vmem, size = 0x9000, scoped, tag = 'internal scratch']
  #allocation2 [shape = 'f32[4,128]{1,0:T(4,128)}', space=vmem, size = 0x800, scoped, tag = 'scratch operand']
  #allocation3 [shape = 'f32[4,128]{1,0:T(4,128)}', space=vmem, size = 0x800, scoped, tag = 'scratch operand']
  #allocation4 [shape = 'f32[4,1]{1,0:T(4,128)}', space=vmem, size = 0x800, scoped, tag = 'scratch operand']
  #allocation5 [shape = 'f32[1,128]{1,0:T(1,128)}', space=vmem, size = 0x200, scoped, tag = 'scratch operand']
  #allocation6 [shape = 's32[1]{0}', space=sflag, size = 0x4, scoped, tag = 'scratch operand']
  #allocation15 [shape = 's32[]', space=sflag, size = 0x4, offset = 0, fixed_abs, tag = 'sflag constant byte address 0x0 - dummy sync flag']
  #allocation16 [shape = 's32[]', space=sflag, size = 0x4, offset = 0, fixed_abs, tag = 'sflag constant byte address 0x0 - dummy sync flag']
  #allocation17 [shape = 'u32[]', space=smem, size = 0x4, offset = 0x44, fixed_abs, tag = 'smem constant byte address 0x44 - assertion arg 0']
  #allocation18 [shape = 'u32[]', space=smem, size = 0x4, offset = 0x48, fixed_abs, tag = 'smem constant byte address 0x48 - assertion arg 1']
  %s0 = inlined_call_operand.hbm [shape: f32[16,128], index: 0, kind: input, shape index: {}]
  %s1 = inlined_call_operand.hbm [shape: s32[1,16], index: 1, kind: input, shape index: {}]
  %s2 = inlined_call_operand.hbm [shape: f32[4,128], index: 2, kind: input, shape index: {}]
  %s3 = inlined_call_operand.hbm [shape: f32[1,1], index: 3, kind: output, shape index: {0}]
  %s4 = inlined_call_operand.hbm [shape: f32[4,128], index: 4, kind: output, shape index: {1}]
  %5 = xla_tuple %s3, %s4
  %s6 = sld [smem:[#allocation0]]
  $region46: #{tpu_custom_call.1} parent=0
    _
  %s8 = ssub.s32 1, %s6
  %s9 = scalar_select 0, %s8, %s6
  $region1: #{tpu_custom_call.1} parent=0
    #allocation7 [shape = 'u8[8192]{0}', space=vmem, size = 0x2000, scoped, tag = 'input window, operand 0, single buffered']
    #allocation8 [shape = 's32[1]{0}', space=sflag, size = 0x4, scoped, tag = 'scoped memory for tpu_custom_call.1']
    #allocation9 [shape = 's32[1]{0}', space=sflag, size = 0x4, scoped, tag = 'scoped memory for tpu_custom_call.1']
    #allocation10 [shape = 'u8[512]{0}', space=vmem, size = 0x400, scoped, tag = 'input window, operand 1, single buffered']
    #allocation11 [shape = 's32[1]{0}', space=sflag, size = 0x4, scoped, tag = 'scoped memory for tpu_custom_call.1']
    #allocation12 [shape = 'u8[512]{0}', space=vmem, size = 0x400, scoped, tag = 'output window, operand 0, single buffered']
    #allocation13 [shape = 'u8[2048]{0}', space=vmem, size = 0x800, scoped, tag = 'output window, operand 1, single buffered']
    #allocation14 [shape = 's32[1]{0}', space=sflag, size = 0x4, scoped, tag = 'scoped memory for tpu_custom_call.1']
    %10 = vsyncpa [#allocation8], 0
    %11 = vsyncpa [#allocation11], 0
    %12 = vsyncpa [#allocation9], 0
    %13 = vsyncpa [#allocation14], 0
    // Predicated region
    $region2: #{tpu_custom_call.1} parent=1 // pred_check
      _
    $region3: #{tpu_custom_call.1} parent=1 // pred_check_branch
      %15 = sbr.rel (0) target = $region5
    $region4: #{tpu_custom_call.1} parent=1 // pred_region
      %17 = vsyncadd [#allocation8], 0
      %s18 = sshll.u32 %s0, 4
      %s19 = int_to_ptr.hbm [resolvable:$true] %s18
      %s20 = sshll.u32 [#allocation7], 4
      %s21 = int_to_ptr.vmem [resolvable:$true] %s20
      %26 = dma.hbm_to_vmem [thread:$0]  %s19, 256, %s21, [#allocation8], 128, 128, 8
    $region5: #{tpu_custom_call.1} parent=1 // pred_fallthru
      _
    // Predicated region
    $region6: #{tpu_custom_call.1} parent=1 // pred_check
      _
    $region7: #{tpu_custom_call.1} parent=1 // pred_check_branch
      %28 = sbr.rel (0) target = $region9
    $region8: #{tpu_custom_call.1} parent=1 // pred_region
      %30 = vsyncadd [#allocation11], 0
      %s32 = sshll.u32 %s1, 4
      %s33 = int_to_ptr.hbm [resolvable:$true] %s32
      %s34 = sshll.u32 [#allocation10], 4
      %s35 = int_to_ptr.vmem [resolvable:$true] %s34
      %37 = dma.hbm_to_vmem [thread:$0]  %s33, 16, %s35, [#allocation11]
    $region9: #{tpu_custom_call.1} parent=1 // pred_fallthru
      _
    // Predicated region
    $region10: #{tpu_custom_call.1} parent=1 // pred_check
      _
    $region11: #{tpu_custom_call.1} parent=1 // pred_check_branch
      %39 = sbr.rel (0) target = $region13
    $region12: #{tpu_custom_call.1} parent=1 // pred_region
      %41 = dma.done [#allocation8], 256
    $region13: #{tpu_custom_call.1} parent=1 // pred_fallthru
      _
    // Predicated region
    $region14: #{tpu_custom_call.1} parent=1 // pred_check
      _
    $region15: #{tpu_custom_call.1} parent=1 // pred_check_branch
      %43 = sbr.rel (0) target = $region17
    $region16: #{tpu_custom_call.1} parent=1 // pred_region
      %45 = dma.done [#allocation11], 16
    $region17: #{tpu_custom_call.1} parent=1 // pred_fallthru
      _
    %p46 = scmp.eq.s32.totalorder 0, 0
    // Predicated region
    $region18: #{tpu_custom_call.1} parent=1 // pred_check
      %p47 = pneg %p46
    $region19: #{tpu_custom_call.1} parent=1 // pred_check_branch
      %49 = sbr.rel (%p47) target = $region21
    $region20: #{tpu_custom_call.1} parent=1 // pred_region
      // Predicated region
      $region22: #{tpu_custom_call.1} parent=20 // pred_check
        _
      $region23: #{tpu_custom_call.1} parent=20 // pred_check_branch
        %51 = sbr.rel target = $region25
      $region24: #{tpu_custom_call.1} parent=20 // pred_region
        %52 = sst [smem:[#allocation17]] [#allocation16]
        %53 = sst [smem:[#allocation18]] [#allocation15]
      $region25: #{tpu_custom_call.1} parent=20 // pred_fallthru
        _
      %55 = shalt.err (0)
      %s57 = sshll.u32 %s2, 4
      %s58 = int_to_ptr.hbm [resolvable:$true] %s57
      %s59 = sshll.u32 [#allocation2], 4
      %s60 = int_to_ptr.vmem [resolvable:$true] %s59
      %62 = dma.hbm_to_vmem [thread:$0]  %s58, 64, %s60, [#allocation6]
      %63 = vst [vmem:[#allocation3] sm:$0xf] 0.0
      %vm64 = vcmask 3072
      %65 = vst.msk [vmem:[#allocation4] sm:$0xf] %vm64, 0.0
      %66 = vst [vmem:[#allocation5] sm:$0x1] 0.0
    $region21: #{tpu_custom_call.1} parent=1 // pred_fallthru
      _
    %v67 = vld [vmem:[#allocation7] sm:$0xff]
    %v68 = vld [vmem:[#allocation7 + $0x8] sm:$0xff]
    %v69 = vld [vmem:[#allocation10] sm:$0x1]
    %v70 = vlaneseq
    %v71 = vshrl.u32 %v70, 7
    %v72 = vperm.slane %v69, 0
    %vm73 = vcmp.eq.s32.totalorder %v72, %v71
    %v74 = vsel %vm73, 1, 0
    %v75 = vcvt.s32.f32 %v74
    %v76 = vld [vmem:[#allocation3] sm:$0xf]
    %vm77 = vcmask 130048
    %v79 = vsel %vm77, %v75, 0
    %81 = vmatpush.msra.mxu0 0.0
    %82 = vmatpush.msra.mxu0 0.0
    %83 = vmatpush.msra.mxu0 0.0
    %84 = vmatpush.msra.mxu0 0.0
    %85 = vmatpush.msra.mxu0 0.0
    %86 = vmatpush.msra.mxu0 0.0
    %87 = vmatpush.msra.mxu0 0.0
    %88 = vmatpush.msra.mxu0 0.0
    %89 = vmatpush.msra.mxu0 0.0
    %90 = vmatpush.msra.mxu0 0.0
    %91 = vmatpush.msra.mxu0 0.0
    %92 = vmatpush.msra.mxu0 0.0
    %93 = vmatpush.msra.mxu0 0.0
    %94 = vmatpush.msra.mxu0 0.0
    %v95 = vand.u32 %v68, 4294901760
    %96 = vmatpush.msra.mxu0 %v95
    %v97 = vand.u32 %v67, 4294901760
    %98 = vmatpush.msra.mxu0 %v97
    %v99 = vand.u32 %v79, 4294901760
    %v100 = vsub.f32 %v79, %v99
    %v101 = vand.u32 %v100, 4294901760
    %v102 = vsub.f32 %v100, %v101
    %v103 = vand.u32 %v102, 4294901760
    %104 = vmatmul.f32.gmra.mxu0 %v103
    %v105 = vpop.f32.mrf.mxu0
    %v106 = vadd.f32 0.0, %v105
    %107 = vdwg.mxu0
    %108 = vmatpush.msra.mxu0 0.0
    %109 = vmatpush.msra.mxu0 0.0
    %110 = vmatpush.msra.mxu0 0.0
    %111 = vmatpush.msra.mxu0 0.0
    %112 = vmatpush.msra.mxu0 0.0
    %113 = vmatpush.msra.mxu0 0.0
    %114 = vmatpush.msra.mxu0 0.0
    %115 = vmatpush.msra.mxu0 0.0
    %116 = vmatpush.msra.mxu0 0.0
    %117 = vmatpush.msra.mxu0 0.0
    %118 = vmatpush.msra.mxu0 0.0
    %119 = vmatpush.msra.mxu0 0.0
    %120 = vmatpush.msra.mxu0 0.0
    %121 = vmatpush.msra.mxu0 0.0
    %v122 = vand.u32 %v68, 4294901760
    %v123 = vsub.f32 %v68, %v122
    %v124 = vand.u32 %v123, 4294901760
    %v125 = vsub.f32 %v123, %v124
    %v126 = vand.u32 %v125, 4294901760
    %127 = vmatpush.msra.mxu0 %v126
    %v128 = vand.u32 %v67, 4294901760
    %v129 = vsub.f32 %v67, %v128
    %v130 = vand.u32 %v129, 4294901760
    %v131 = vsub.f32 %v129, %v130
    %v132 = vand.u32 %v131, 4294901760
    %133 = vmatpush.msra.mxu0 %v132
    %v134 = vand.u32 %v79, 4294901760
    %135 = vmatmul.f32.gmra.mxu0 %v134
    %v136 = vpop.f32.mrf.mxu0
    %v137 = vadd.f32 %v106, %v136
    %138 = vdwg.mxu0
    %139 = vmatpush.msra.mxu0 0.0
    %140 = vmatpush.msra.mxu0 0.0
    %141 = vmatpush.msra.mxu0 0.0
    %142 = vmatpush.msra.mxu0 0.0
    %143 = vmatpush.msra.mxu0 0.0
    %144 = vmatpush.msra.mxu0 0.0
    %145 = vmatpush.msra.mxu0 0.0
    %146 = vmatpush.msra.mxu0 0.0
    %147 = vmatpush.msra.mxu0 0.0
    %148 = vmatpush.msra.mxu0 0.0
    %149 = vmatpush.msra.mxu0 0.0
    %150 = vmatpush.msra.mxu0 0.0
    %151 = vmatpush.msra.mxu0 0.0
    %152 = vmatpush.msra.mxu0 0.0
    %v153 = vand.u32 %v68, 4294901760
    %v154 = vsub.f32 %v68, %v153
    %155 = vmatpush.msra.mxu0 %v154
    %v156 = vand.u32 %v67, 4294901760
    %v157 = vsub.f32 %v67, %v156
    %158 = vmatpush.msra.mxu0 %v157
    %v159 = vand.u32 %v79, 4294901760
    %v160 = vsub.f32 %v79, %v159
    %161 = vmatmul.f32.gmra.mxu0 %v160
    %v162 = vpop.f32.mrf.mxu0
    %v163 = vadd.f32 %v137, %v162
    %164 = vdwg.mxu0
    %165 = vmatpush.msra.mxu0 0.0
    %166 = vmatpush.msra.mxu0 0.0
    %167 = vmatpush.msra.mxu0 0.0
    %168 = vmatpush.msra.mxu0 0.0
    %169 = vmatpush.msra.mxu0 0.0
    %170 = vmatpush.msra.mxu0 0.0
    %171 = vmatpush.msra.mxu0 0.0
    %172 = vmatpush.msra.mxu0 0.0
    %173 = vmatpush.msra.mxu0 0.0
    %174 = vmatpush.msra.mxu0 0.0
    %175 = vmatpush.msra.mxu0 0.0
    %176 = vmatpush.msra.mxu0 0.0
    %177 = vmatpush.msra.mxu0 0.0
    %178 = vmatpush.msra.mxu0 0.0
    %v179 = vand.u32 %v68, 4294901760
    %180 = vmatpush.msra.mxu0 %v179
    %v181 = vand.u32 %v67, 4294901760
    %182 = vmatpush.msra.mxu0 %v181
    %v183 = vand.u32 %v79, 4294901760
    %v184 = vsub.f32 %v79, %v183
    %v185 = vand.u32 %v184, 4294901760
    %186 = vmatmul.f32.gmra.mxu0 %v185
    %v187 = vpop.f32.mrf.mxu0
    %v188 = vadd.f32 %v163, %v187
    %189 = vdwg.mxu0
    %190 = vmatpush.msra.mxu0 0.0
    %191 = vmatpush.msra.mxu0 0.0
    %192 = vmatpush.msra.mxu0 0.0
    %193 = vmatpush.msra.mxu0 0.0
    %194 = vmatpush.msra.mxu0 0.0
    %195 = vmatpush.msra.mxu0 0.0
    %196 = vmatpush.msra.mxu0 0.0
    %197 = vmatpush.msra.mxu0 0.0
    %198 = vmatpush.msra.mxu0 0.0
    %199 = vmatpush.msra.mxu0 0.0
    %200 = vmatpush.msra.mxu0 0.0
    %201 = vmatpush.msra.mxu0 0.0
    %202 = vmatpush.msra.mxu0 0.0
    %203 = vmatpush.msra.mxu0 0.0
    %v204 = vand.u32 %v68, 4294901760
    %v205 = vsub.f32 %v68, %v204
    %v206 = vand.u32 %v205, 4294901760
    %207 = vmatpush.msra.mxu0 %v206
    %v208 = vand.u32 %v67, 4294901760
    %v209 = vsub.f32 %v67, %v208
    %v210 = vand.u32 %v209, 4294901760
    %211 = vmatpush.msra.mxu0 %v210
    %v212 = vand.u32 %v79, 4294901760
    %213 = vmatmul.f32.gmra.mxu0 %v212
    %v214 = vpop.f32.mrf.mxu0
    %v215 = vadd.f32 %v188, %v214
    %216 = vdwg.mxu0
    %217 = vmatpush.msra.mxu0 0.0
    %218 = vmatpush.msra.mxu0 0.0
    %219 = vmatpush.msra.mxu0 0.0
    %220 = vmatpush.msra.mxu0 0.0
    %221 = vmatpush.msra.mxu0 0.0
    %222 = vmatpush.msra.mxu0 0.0
    %223 = vmatpush.msra.mxu0 0.0
    %224 = vmatpush.msra.mxu0 0.0
    %225 = vmatpush.msra.mxu0 0.0
    %226 = vmatpush.msra.mxu0 0.0
    %227 = vmatpush.msra.mxu0 0.0
    %228 = vmatpush.msra.mxu0 0.0
    %229 = vmatpush.msra.mxu0 0.0
    %230 = vmatpush.msra.mxu0 0.0
    %v231 = vand.u32 %v68, 4294901760
    %232 = vmatpush.msra.mxu0 %v231
    %v233 = vand.u32 %v67, 4294901760
    %234 = vmatpush.msra.mxu0 %v233
    %v235 = vand.u32 %v79, 4294901760
    %236 = vmatmul.f32.gmra.mxu0 %v235
    %v237 = vpop.f32.mrf.mxu0
    %v238 = vadd.f32 %v215, %v237
    %239 = vdwg.mxu0
    %v240 = vadd.f32 %v76, %v238
    %241 = vst [vmem:[#allocation3] sm:$0xf] %v240
    %v242 = vld [vmem:[#allocation4] sm:$0xf]
    %vm243 = vcmask 125952
    %v244 = vsel %vm243, %v75, 0.0
    %245 = vadd.xlane.f32.xlu0 %v244
    %v246 = vpop.xlane.xlu0 %245
    %v247 = vadd.f32 %v242, %v246
    %vm248 = vcmask 3072
    %249 = vst.msk [vmem:[#allocation4] sm:$0xf] %vm248, %v247
    %v250 = vld [vmem:[#allocation5] sm:$0x1]
    %v251 = vmul.f32 %v67, %v67
    %v252 = vmul.f32 %v68, %v68
    %v253 = vadd.f32 %v251, %v252
    %v254 = vrot.slane %v253, 4
    %v255 = vadd.f32 %v253, %v254
    %v256 = vrot.slane %v255, 2
    %v257 = vadd.f32 %v255, %v256
    %v258 = vrot.slane %v257, 1
    %v259 = vadd.f32 %v257, %v258
    %v260 = vadd.f32 %v250, %v259
    %261 = vst [vmem:[#allocation5] sm:$0x1] %v260
    // Predicated region
    $region26: #{tpu_custom_call.1} parent=1 // pred_check
      %p262 = pneg %p46
    $region27: #{tpu_custom_call.1} parent=1 // pred_check_branch
      %264 = sbr.rel (%p262) target = $region29
    $region28: #{tpu_custom_call.1} parent=1 // pred_region
      %s265 = smul.u32 4, 1
      %s266 = sshll.u32 %s265, 4
      %267 = dma.done [#allocation6], %s266
      %v268 = vld [vmem:[#allocation2] sm:$0xf]
      %v269 = vld [vmem:[#allocation3] sm:$0xf]
      %v270 = vld [vmem:[#allocation4] sm:$0xf]
      %v271 = vld [vmem:[#allocation5] sm:$0x1]
      %vm272 = vcmask 1040384
      %v273 = vsel %vm272, %v271, 0.0
      %274 = vadd.xlane.f32.xlu0 %v273
      %v275 = vpop.xlane.xlu0 %274
      %v276 = vrot.slane %v275, 4
      %v277 = vadd.f32 %v275, %v276
      %v278 = vrot.slane %v277, 2
      %v279 = vadd.f32 %v277, %v278
      %v280 = vrot.slane %v279, 1
      %v281 = vadd.f32 %v279, %v280
      %s282 = vtos %v281
      %v283 = vstv %s282
      %v284 = vmul.f32 %v269, %v268
      %vm285 = vcmask 1043456
      %v286 = vsel %vm285, %v284, 0.0
      %287 = vadd.xlane.f32.xlu0 %v286
      %v288 = vpop.xlane.xlu0 %287
      %v289 = vrot.slane %v288, 4
      %v290 = vadd.f32 %v288, %v289
      %v291 = vrot.slane %v290, 2
      %v292 = vadd.f32 %v290, %v291
      %v293 = vrot.slane %v292, 1
      %v294 = vadd.f32 %v292, %v293
      %s295 = vtos %v294
      %v296 = vmul.f32 %v268, %v268
      %v297 = vsel %vm285, %v296, 0.0
      %298 = vadd.xlane.f32.xlu0 %v297
      %v299 = vpop.xlane.xlu0 %298
      %v300 = vmul.f32 %v270, %v299
      %v301 = vsel %vm248, %v300, 0.0
      %302 = vadd.xlane.f32.xlu0 %v301
      %v303 = vpop.xlane.xlu0 %302
      %v304 = vrot.slane %v303, 4
      %v305 = vadd.f32 %v303, %v304
      %v306 = vrot.slane %v305, 2
      %v307 = vadd.f32 %v305, %v306
      %v308 = vrot.slane %v307, 1
      %v309 = vadd.f32 %v307, %v308
      %s310 = vtos %v309
      %s311 = smul.f32 %s295, 2.0
      %v312 = vstv %s311
      %v313 = vsub.f32 %v283, %v312
      %v314 = vstv %s310
      %v315 = vadd.f32 %v313, %v314
      %v316 = vmul.f32 %v315, 0.03125
      %vm317 = vcmask 0
      %318 = vst.msk [vmem:[#allocation12] sm:$0x1] %vm317, %v316
      %v319 = vmax.f32 %v270, 1.0
      %321 = vset.pattern.permute.xlu0 0
      %322 = vperm.xlu0 %321, %v319
      %v323 = vpop.permute.xlu0 %322
      %v325 = vrcp.pop %v323
      %v326 = vmul.f32 %v323, %v325
      %v327 = vsub.f32 1.0, %v326
      %v328 = vmul.f32 %v325, %v327
      %v329 = vadd.f32 %v325, %v328
      %vm330 = vweird.f32 %v323
      %vm331 = vweird.f32 %v325
      %vm332 = vmor %vm330, %vm331
      %v333 = vsel %vm332, %v325, %v329
      %v334 = vand.u32 2147483647, %v323
      %vm335 = vcmp.eq.f32.partialorder %v334, 8.507059e+37
      %v336 = vand.u32 %v323, 2147483648
      %v337 = vor.u32 1.1754944e-38, %v336
      %v338 = vsel %vm335, %v337, %v333
      %v339 = vmul.f32 %v269, %v338
      %v340 = vmul.f32 %v268, 0.5
      %v341 = vmul.f32 %v339, 0.5
      %v342 = vadd.f32 %v340, %v341
      %vm343 = vcmp.gt.f32.partialorder %v270, 0.0
      %v344 = vsel %vm343, 1, 0
      %345 = vset.pattern.permute.xlu0 0
      %346 = vperm.xlu0 %345, %v344
      %v347 = vpop.permute.xlu0 %346
      %vm348 = vcmp.eq.s32.totalorder %v347, 1
      %v349 = vsel %vm348, %v342, %v268
      %350 = vst [vmem:[#allocation13] sm:$0xf] %v349
    $region29: #{tpu_custom_call.1} parent=1 // pred_fallthru
      _
    // Predicated region
    $region30: #{tpu_custom_call.1} parent=1 // pred_check
      _
    $region31: #{tpu_custom_call.1} parent=1 // pred_check_branch
      %352 = sbr.rel (0) target = $region33
    $region32: #{tpu_custom_call.1} parent=1 // pred_region
      %354 = vsyncadd [#allocation9], 0
      %s356 = sshll.u32 [#allocation12], 4
      %s357 = int_to_ptr.vmem [resolvable:$true] %s356
      %s358 = sshll.u32 %s3, 4
      %s359 = int_to_ptr.hbm [resolvable:$true] %s358
      %361 = dma.vmem_to_hbm [thread:$0]  %s357, 16, %s359, [#allocation9]
    $region33: #{tpu_custom_call.1} parent=1 // pred_fallthru
      _
    // Predicated region
    $region34: #{tpu_custom_call.1} parent=1 // pred_check
      _
    $region35: #{tpu_custom_call.1} parent=1 // pred_check_branch
      %363 = sbr.rel (0) target = $region37
    $region36: #{tpu_custom_call.1} parent=1 // pred_region
      %365 = vsyncadd [#allocation14], 0
      %s367 = sshll.u32 [#allocation13], 4
      %s368 = int_to_ptr.vmem [resolvable:$true] %s367
      %s369 = sshll.u32 %s4, 4
      %s370 = int_to_ptr.hbm [resolvable:$true] %s369
      %372 = dma.vmem_to_hbm [thread:$0]  %s368, 64, %s370, [#allocation14]
    $region37: #{tpu_custom_call.1} parent=1 // pred_fallthru
      _
    // Predicated region
    $region38: #{tpu_custom_call.1} parent=1 // pred_check
      _
    $region39: #{tpu_custom_call.1} parent=1 // pred_check_branch
      %374 = sbr.rel (0) target = $region41
    $region40: #{tpu_custom_call.1} parent=1 // pred_region
      %376 = dma.done [#allocation9], 16
    $region41: #{tpu_custom_call.1} parent=1 // pred_fallthru
      _
    // Predicated region
    $region42: #{tpu_custom_call.1} parent=1 // pred_check
      _
    $region43: #{tpu_custom_call.1} parent=1 // pred_check_branch
      %378 = sbr.rel (0) target = $region45
    $region44: #{tpu_custom_call.1} parent=1 // pred_region
      %380 = dma.done [#allocation14], 64
    $region45: #{tpu_custom_call.1} parent=1 // pred_fallthru
      _
    %381 = vsyncpa [#allocation8], 1
    %382 = vsyncpa [#allocation11], 1
    %383 = vsyncpa [#allocation9], 1
    %384 = vsyncpa [#allocation14], 1
  %385 = vsyncmov [#allocation6]
  %s386 = vpop.sfrf %385
  %p387 = scmp.eq.s32.totalorder %s386, 0
  %p388 = pneg %p387
  %390 = shalt.err (%p388)

</llo_original>
